<compile_context>
chip_gen: v7x
topology: tpu7x:2x2x1
jax: 0.10.0
libtpu: 0.0.40
codegen_flags: <defaults>
</compile_context>

<pallas_src>
import math

import jax
import jax.numpy as jnp
from jax.experimental import pallas as pl
from jax.experimental.pallas import tpu as pltpu


def _round_up(x, m):
    return ((x + m - 1) // m) * m


def _cdiv(a, b):
    return -(-a // b)


# ----------------------------------------------------------------------------
# Kernels
# ----------------------------------------------------------------------------
def _group_linear_dense_kernel(x_ref, w_ref, b_ref, o_ref):
    # x_ref: (Bt, K)   w_ref: (K, N) block-diagonal dense   b_ref: (1, N)
    # o_ref: (Bt, N)   -- one MXU matmul, one VPU broadcast add, one dense store.
    acc = jnp.dot(x_ref[...], w_ref[...], preferred_element_type=jnp.float32)
    o_ref[...] = (acc + b_ref[...].astype(jnp.float32)).astype(o_ref.dtype)


def _group_linear_grouped_kernel(x_ref, w_ref, b_ref, o_ref):
    # Only used when I_g and O_g are multiples of 128 (tile-aligned slices).
    # x_ref: (Bt, G*I_g)   w_ref: (G, I_g, O_g)   b_ref: (1, G*O_g)
    groups, in_pg, out_pg = w_ref.shape
    for g in range(groups):
        xg = x_ref[:, g * in_pg:(g + 1) * in_pg]                 # (Bt, I_g)
        acc = jnp.dot(xg, w_ref[g], preferred_element_type=jnp.float32)
        bg = b_ref[:, g * out_pg:(g + 1) * out_pg].astype(jnp.float32)
        o_ref[:, g * out_pg:(g + 1) * out_pg] = (acc + bg).astype(o_ref.dtype)


# ----------------------------------------------------------------------------
# Sizing helpers
# ----------------------------------------------------------------------------
def _vmem_budget():
    """(working-set budget bytes, vmem_limit_bytes) sized per TPU generation."""
    vmem_phys = 64 * 1024 * 1024          # conservative default (v7x-class)
    try:
        info = pltpu.get_tpu_info()
        v = getattr(info, "vmem_capacity_bytes", None)
        if v:
            vmem_phys = int(v)
    except Exception:
        pass
    if vmem_phys <= 64 * 1024 * 1024:     # v7x: 64 MiB per TensorCore
        return 32 * 1024 * 1024, 48 * 1024 * 1024
    # v5e / v6e: 128 MiB physical VMEM
    return 48 * 1024 * 1024, 64 * 1024 * 1024


def _fold_factor(in_features, out_features, max_fold=64):
    """Fold R batch rows per kernel row so both load and store are >=128 lanes."""
    r = 1
    while r < max_fold and (r * out_features < 128 or r * in_features < 128):
        r *= 2
    return r


def _pick_block_rows(rows, row_bytes, budget_bytes, sublane):
    """Largest B-tile (in kernel rows) whose double-buffered slabs fit budget."""
    bt = max(budget_bytes // max(row_bytes, 1), sublane)
    if bt >= 512:
        bt = (bt // 512) * 512
    elif bt >= 128:
        bt = (bt // 128) * 128
    else:
        bt = (bt // sublane) * sublane
    # For large inputs keep >=2 grid steps so the "parallel" B axis can feed
    # both v7x TensorCores (negligible extra step cost on single-TC chips).
    if rows >= 2 * 512:
        bt = min(bt, _round_up(_cdiv(rows, 2), 512))
    bt = min(bt, _round_up(rows, sublane))
    return max(bt, sublane)


# ----------------------------------------------------------------------------
# Public wrapper
# ----------------------------------------------------------------------------
def group_linear(x, weight, bias=None, *, block_b=None, compute_dtype=None):
    """x: (*, in_features); weight: (G, O_g, I_g); bias: (G, O_g) or None.

    block_b, if given, is the tile size in *kernel rows* (folded rows).
    compute_dtype (e.g. jnp.bfloat16) optionally casts activations + weights
    before the matmul; accumulation stays f32 (opt-in, slightly changes numerics).
    """
    groups, out_pg, in_pg = weight.shape
    in_features = groups * in_pg
    out_features = groups * out_pg
    batch_shape = x.shape[:-1]
    assert x.shape[-1] == in_features

    if bias is None:
        bias = jnp.zeros((groups, out_pg), dtype=weight.dtype)

    out_dtype = x.dtype
    B = int(math.prod(batch_shape)) if batch_shape else 1
    if B == 0:  # empty-grid guard
        return jnp.zeros((*batch_shape, out_features), dtype=out_dtype)

    x2 = x.reshape(B, in_features)
    if compute_dtype is not None:
        x2 = x2.astype(compute_dtype)
        weight = weight.astype(compute_dtype)
        bias = bias.astype(compute_dtype)
    else:
        weight = weight.astype(x2.dtype)
        bias = bias.astype(x2.dtype)

    itemsize = x2.dtype.itemsize
    sublane = 16 if itemsize == 2 else 8
    budget_bytes, vmem_limit = _vmem_budget()

    # Path selection: dense block-diagonal matmul unless the per-group dims are
    # already 128-aligned (then per-group slices are free) or the dense weight
    # would be excessively large.
    use_grouped = (in_pg % 128 == 0 and out_pg % 128 == 0)
    R = 1
    if not use_grouped:
        R = _fold_factor(in_features, out_features)
        if R * R * in_features * out_features * itemsize > 32 * 1024 * 1024:
            R = 1
            if in_features * out_features * itemsize > 32 * 1024 * 1024:
                use_grouped = True  # dense weight too big; safe fallback

    lane_in = R * in_features
    lane_out = R * out_features
    rows_raw = _cdiv(B, R)

    row_bytes = 2 * (lane_in + lane_out) * itemsize  # double-buffered in + out
    if block_b is None:
        bt = _pick_block_rows(rows_raw, row_bytes, budget_bytes, sublane)
    else:
        bt = max(sublane,
                 _round_up(min(block_b, _round_up(rows_raw, sublane)), sublane))

    rows_p = _round_up(rows_raw, bt)
    Bp = rows_p * R
    if Bp != B:
        x2 = jnp.pad(x2, ((0, Bp - B), (0, 0)))
    nb = rows_p // bt

    # One-time HBM-side weight/bias relayout (outside the kernel).
    w_t = jnp.transpose(weight, (0, 2, 1))                       # (G, I_g, O_g)
    if use_grouped:
        w_op = w_t
        b_op = bias.reshape(1, out_features)
        x_op = x2                                                # (Bp, in_features)
        kernel = _group_linear_grouped_kernel
        in_specs = [
            pl.BlockSpec((bt, in_features), lambda i: (i, 0)),
            pl.BlockSpec((groups, in_pg, out_pg), lambda i: (0, 0, 0)),
            pl.BlockSpec((1, out_features), lambda i: (0, 0)),
        ]
    else:
        eye_g = jnp.eye(groups, dtype=w_t.dtype)
        w_dense = jnp.einsum('gio,gh->giho', w_t, eye_g).reshape(
            in_features, out_features)                           # block-diagonal
        if R > 1:
            eye_r = jnp.eye(R, dtype=w_dense.dtype)
            w_op = jnp.einsum('rs,io->riso', eye_r, w_dense).reshape(
                lane_in, lane_out)                               # R-fold replicate
            b_op = jnp.tile(bias.reshape(1, out_features), (1, R))
        else:
            w_op = w_dense
            b_op = bias.reshape(1, out_features)
        x_op = x2.reshape(rows_p, lane_in)                       # free, contiguous
        kernel = _group_linear_dense_kernel
        in_specs = [
            pl.BlockSpec((bt, lane_in), lambda i: (i, 0)),
            pl.BlockSpec((lane_in, lane_out), lambda i: (0, 0)),
            pl.BlockSpec((1, lane_out), lambda i: (0, 0)),
        ]

    flops = 2 * rows_p * lane_in * lane_out
    bytes_accessed = (rows_p * (lane_in + lane_out)
                      + int(w_op.size) + int(b_op.size)) * itemsize

    out = pl.pallas_call(
        kernel,
        out_shape=jax.ShapeDtypeStruct((rows_p, lane_out), out_dtype),
        grid_spec=pltpu.PrefetchScalarGridSpec(
            num_scalar_prefetch=0,
            grid=(nb,),
            in_specs=in_specs,
            out_specs=pl.BlockSpec((bt, lane_out), lambda i: (i, 0)),
        ),
        compiler_params=pltpu.CompilerParams(
            dimension_semantics=("parallel",),       # shards B-tiles on v7x TCs
            vmem_limit_bytes=vmem_limit,
        ),
        cost_estimate=pl.CostEstimate(
            flops=int(flops), transcendentals=0,
            bytes_accessed=int(bytes_accessed)),
    )(x_op, w_op, b_op)

    out = out.reshape(Bp, out_features)
    if Bp != B:
        out = out[:B]
    return out.reshape(*batch_shape, out_features)


# ----------------------------------------------------------------------------
# Reference + init
# ----------------------------------------------------------------------------
def group_linear_ref(x, weight, bias):
    """Pure-JAX reference mirroring the PyTorch forward."""
    groups, out_per_group, in_per_group = weight.shape
    batch_shape = x.shape[:-1]
    xg = x.reshape(*batch_shape, groups, in_per_group, 1)
    out = jnp.matmul(weight, xg) + bias[..., None]
    return out.reshape(*batch_shape, groups * out_per_group)


def init_params(key, in_features, out_features, groups, dtype=jnp.float32):
    """kaiming_uniform_(nonlinearity='linear') per group + zero bias."""
    in_per_group = in_features // groups
    out_per_group = out_features // groups
    bound = math.sqrt(3.0) / math.sqrt(in_per_group)   # gain=1, fan_in=I_g
    weight = jax.random.uniform(
        key, (groups, out_per_group, in_per_group),
        minval=-bound, maxval=bound, dtype=dtype)
    bias = jnp.zeros((groups, out_per_group), dtype=dtype)
    return weight, bias


if __name__ == "__main__":
    in_features = 32
    out_features = 64
    groups = 4
    batch_shape = (2, 8, 16)   # arbitrary leading batch dims, as the module allows

    key = jax.random.PRNGKey(0)
    k_w, k_x, k_x2, k_w2, k_x3 = jax.random.split(key, 5)
    weight, bias = init_params(k_w, in_features, out_features, groups)
    x = jax.random.normal(k_x, (*batch_shape, in_features), dtype=jnp.float32)

    ref = group_linear_ref(x, weight, bias)

    # Default: dense block-diagonal path with row folding, single big tile.
    out = jax.block_until_ready(group_linear(x, weight, bias))
    assert out.shape == (*batch_shape, out_features), out.shape
    assert jnp.allclose(out, ref, atol=1e-4, rtol=1e-5), \
        float(jnp.max(jnp.abs(out - ref)))

    # Forced small tile: exercises the multi-step tiled grid.
    out_tiled = jax.block_until_ready(group_linear(x, weight, bias, block_b=8))
    assert jnp.allclose(out_tiled, ref, atol=1e-4, rtol=1e-5), \
        float(jnp.max(jnp.abs(out_tiled - ref)))

    # bias=None path (module allows bias=False; zeros == default init here).
    out_nb = jax.block_until_ready(group_linear(x, weight, None))
    assert jnp.allclose(out_nb, ref, atol=1e-4, rtol=1e-5), \
        float(jnp.max(jnp.abs(out_nb - ref)))

    # Ragged batch: exercises padding (B not a multiple of fold * sublane).
    x_r = jax.random.normal(k_x2, (3, 5, in_features), dtype=jnp.float32)
    out_r = jax.block_until_ready(group_linear(x_r, weight, bias))
    ref_r = group_linear_ref(x_r, weight, bias)
    assert out_r.shape == (3, 5, out_features), out_r.shape
    assert jnp.allclose(out_r, ref_r, atol=1e-4, rtol=1e-5), \
        float(jnp.max(jnp.abs(out_r - ref_r)))

    # 128-aligned per-group dims: exercises the grouped (non-dense) path.
    w2, b2 = init_params(k_w2, 256, 256, 2)
    x2 = jax.random.normal(k_x3, (4, 16, 256), dtype=jnp.float32)
    out2 = jax.block_until_ready(group_linear(x2, w2, b2))
    ref2 = group_linear_ref(x2, w2, b2)
    assert jnp.allclose(out2, ref2, atol=1e-4, rtol=1e-5), \
        float(jnp.max(jnp.abs(out2 - ref2)))

    print("KERNEL_OK")
</pallas_src>

<mosaic_0001>
module attributes {stable_mosaic.version = 11 : i64} {
  func.func @_group_linear_dense_kernel(%arg0: i32, %arg1: memref<64x128xf32, #tpu.memory_space<vmem>>, %arg2: memref<128x256xf32, #tpu.memory_space<vmem>>, %arg3: memref<1x256xf32, #tpu.memory_space<vmem>>, %arg4: memref<64x256xf32, #tpu.memory_space<vmem>>) attributes {dimension_semantics = [#tpu.dimension_semantics<parallel>], iteration_bounds = array<i64: 1>, scalar_prefetch = 0 : i64, scratch_operands = 0 : i64, tpu.core_type = #tpu.core_type<tc>, window_params = [{transform_indices = @transform_0, window_bounds = array<i64: 64, 128>}, {pipeline_mode = #tpu.pipeline_mode<synchronous>, transform_indices = @transform_1, window_bounds = array<i64: 128, 256>}, {pipeline_mode = #tpu.pipeline_mode<synchronous>, transform_indices = @transform_2, window_bounds = array<i64: 1, 256>}, {transform_indices = @transform_3, window_bounds = array<i64: 64, 256>}]} {
    %c0 = arith.constant 0 : index
    %c0_0 = arith.constant 0 : index
    %0 = vector.load %arg1[%c0, %c0_0] : memref<64x128xf32, #tpu.memory_space<vmem>>, vector<64x128xf32>
    %c0_1 = arith.constant 0 : index
    %c0_2 = arith.constant 0 : index
    %1 = vector.load %arg2[%c0_1, %c0_2] : memref<128x256xf32, #tpu.memory_space<vmem>>, vector<128x256xf32>
    %cst = arith.constant dense<0.000000e+00> : vector<64x256xf32>
    %2 = tpu.matmul %0, %1, %cst {dimension_numbers = #tpu.dot_dimension_numbers<[1], [0], [0], [1], [0, 0, 1, 1], [], []>} : vector<64x128xf32>, vector<128x256xf32>, vector<64x256xf32> -> vector<64x256xf32>
    %c0_3 = arith.constant 0 : index
    %c0_4 = arith.constant 0 : index
    %3 = vector.load %arg3[%c0_3, %c0_4] : memref<1x256xf32, #tpu.memory_space<vmem>>, vector<1x256xf32>
    %4 = vector.broadcast %3 : vector<1x256xf32> to vector<64x256xf32>
    %5 = arith.addf %2, %4 : vector<64x256xf32>
    %c0_5 = arith.constant 0 : index
    %c0_6 = arith.constant 0 : index
    %6 = vector.load %arg4[%c0_5, %c0_6] : memref<64x256xf32, #tpu.memory_space<vmem>>, vector<64x256xf32>
    tpu.vector_store %arg4[%c0_5, %c0_6], %5 {strides = array<i32>} : memref<64x256xf32, #tpu.memory_space<vmem>>, vector<64x256xf32>,
    return
  }
  func.func @transform_0(%arg0: i32) -> (i32, i32) {
    %c0_i32 = arith.constant 0 : i32
    %c0_i32_0 = arith.constant 0 : i32
    return %arg0, %c0_i32 : i32, i32
  }
  func.func @transform_1(%arg0: i32) -> (i32, i32) {
    %c0_i32 = arith.constant 0 : i32
    %c0_i32_0 = arith.constant 0 : i32
    %c0_i32_1 = arith.constant 0 : i32
    return %c0_i32, %c0_i32_0 : i32, i32
  }
  func.func @transform_2(%arg0: i32) -> (i32, i32) {
    %c0_i32 = arith.constant 0 : i32
    %c0_i32_0 = arith.constant 0 : i32
    %c0_i32_1 = arith.constant 0 : i32
    return %c0_i32, %c0_i32_0 : i32, i32
  }
  func.func @transform_3(%arg0: i32) -> (i32, i32) {
    %c0_i32 = arith.constant 0 : i32
    %c0_i32_0 = arith.constant 0 : i32
    return %arg0, %c0_i32 : i32, i32
  }
}

</mosaic_0001>

<llo_original>
// kernel: tpu_custom_call.1
$region0: #{tpu_custom_call.1}
  #allocation0 [shape = 'u32[]', space=smem, size = 0x4, offset = 0x4, fixed_abs, tag = 'smem constant byte address 0x4 - core index']
  #allocation1 [shape = 'u32[144,128]{1,0:T(1,128)}', space=vmem, size = 0x12000, scoped, tag = 'internal scratch']
  %s0 = inlined_call_operand.hbm [shape: f32[64,128], index: 0, kind: input, shape index: {}]
  %s1 = inlined_call_operand.hbm [shape: f32[128,256], index: 1, kind: input, shape index: {}]
  %s2 = inlined_call_operand.vmem [shape: f32[1,256], index: 2, kind: input, shape index: {}]
  %s3 = inlined_call_operand.hbm [shape: f32[64,256], index: 3, kind: output, shape index: {}]
  %s4 = sld [smem:[#allocation0]]
  $region30: #{tpu_custom_call.1} parent=0
    _
  %s6 = ssub.s32 1, %s4
  %s7 = scalar_select 0, %s6, %s4
  $region1: #{tpu_custom_call.1} parent=0
    #allocation2 [shape = 'u8[32768]{0}', space=vmem, size = 0x8000, scoped, tag = 'input window, operand 0, single buffered']
    #allocation3 [shape = 's32[1]{0}', space=sflag, size = 0x4, scoped, tag = 'scoped memory for tpu_custom_call.1']
    #allocation4 [shape = 's32[1]{0}', space=sflag, size = 0x4, scoped, tag = 'scoped memory for tpu_custom_call.1']
    #allocation5 [shape = 'u8[131072]{0}', space=vmem, size = 0x20000, scoped, tag = 'input window, operand 1, single buffered']
    #allocation6 [shape = 's32[1]{0}', space=sflag, size = 0x4, scoped, tag = 'scoped memory for tpu_custom_call.1']
    #allocation7 [shape = 'u8[65536]{0}', space=vmem, size = 0x10000, scoped, tag = 'output window, operand 0, single buffered']
    %8 = vsyncpa [#allocation3], 0
    %9 = vsyncpa [#allocation6], 0
    %10 = vsyncpa [#allocation4], 0
    // Predicated region
    $region2: #{tpu_custom_call.1} parent=1 // pred_check
      _
    $region3: #{tpu_custom_call.1} parent=1 // pred_check_branch
      %12 = sbr.rel (0) target = $region5
    $region4: #{tpu_custom_call.1} parent=1 // pred_region
      %s14 = ssub.s32 1024, 1024
      %15 = vsyncadd [#allocation3], %s14
      %s16 = sshll.u32 [#allocation2], 4
      %s17 = int_to_ptr.vmem [resolvable:$true] %s16
      %22 = dma.hbm_to_vmem [thread:$0]  %s0, 1024, %s17, [#allocation3], 128, 128, 8
    $region5: #{tpu_custom_call.1} parent=1 // pred_fallthru
      _
    // Predicated region
    $region6: #{tpu_custom_call.1} parent=1 // pred_check
      _
    $region7: #{tpu_custom_call.1} parent=1 // pred_check_branch
      %24 = sbr.rel (0) target = $region9
    $region8: #{tpu_custom_call.1} parent=1 // pred_region
      %s26 = ssub.s32 4096, 4096
      %27 = vsyncadd [#allocation6], %s26
      %s28 = sshll.u32 [#allocation5], 4
      %s29 = int_to_ptr.vmem [resolvable:$true] %s28
      %34 = dma.hbm_to_vmem [thread:$0]  %s1, 4096, %s29, [#allocation6], 256, 256, 16
    $region9: #{tpu_custom_call.1} parent=1 // pred_fallthru
      _
    // Predicated region
    $region10: #{tpu_custom_call.1} parent=1 // pred_check
      _
    $region11: #{tpu_custom_call.1} parent=1 // pred_check_branch
      %36 = sbr.rel (0) target = $region13
    $region12: #{tpu_custom_call.1} parent=1 // pred_region
      _
    $region13: #{tpu_custom_call.1} parent=1 // pred_fallthru
      _
    // Predicated region
    $region14: #{tpu_custom_call.1} parent=1 // pred_check
      _
    $region15: #{tpu_custom_call.1} parent=1 // pred_check_branch
      %38 = sbr.rel (0) target = $region17
    $region16: #{tpu_custom_call.1} parent=1 // pred_region
      %39 = dma.done [#allocation3], 1024
    $region17: #{tpu_custom_call.1} parent=1 // pred_fallthru
      _
    // Predicated region
    $region18: #{tpu_custom_call.1} parent=1 // pred_check
      _
    $region19: #{tpu_custom_call.1} parent=1 // pred_check_branch
      %41 = sbr.rel (0) target = $region21
    $region20: #{tpu_custom_call.1} parent=1 // pred_region
      %42 = dma.done [#allocation6], 4096
    $region21: #{tpu_custom_call.1} parent=1 // pred_fallthru
      _
    %v43 = vld [vmem:[#allocation2] sm:$0xff]
    %v44 = vld [vmem:[#allocation2 + $0x8] sm:$0xff]
    %v45 = vld [vmem:[#allocation2 + $0x10] sm:$0xff]
    %v46 = vld [vmem:[#allocation2 + $0x18] sm:$0xff]
    %v47 = vld [vmem:[#allocation2 + $0x20] sm:$0xff]
    %v48 = vld [vmem:[#allocation2 + $0x28] sm:$0xff]
    %v49 = vld [vmem:[#allocation2 + $0x30] sm:$0xff]
    %v50 = vld [vmem:[#allocation2 + $0x38] sm:$0xff]
    %v51 = vld [vmem:[#allocation5] sm:$0xff]
    %v52 = vld [vmem:[#allocation5 + $0x8] sm:$0xff]
    %v53 = vld [vmem:[#allocation5 + $0x10] sm:$0xff]
    %v54 = vld [vmem:[#allocation5 + $0x18] sm:$0xff]
    %v55 = vld [vmem:[#allocation5 + $0x20] sm:$0xff]
    %v56 = vld [vmem:[#allocation5 + $0x28] sm:$0xff]
    %v57 = vld [vmem:[#allocation5 + $0x30] sm:$0xff]
    %v58 = vld [vmem:[#allocation5 + $0x38] sm:$0xff]
    %v59 = vld [vmem:[#allocation5 + $0x40] sm:$0xff]
    %v60 = vld [vmem:[#allocation5 + $0x48] sm:$0xff]
    %v61 = vld [vmem:[#allocation5 + $0x50] sm:$0xff]
    %v62 = vld [vmem:[#allocation5 + $0x58] sm:$0xff]
    %v63 = vld [vmem:[#allocation5 + $0x60] sm:$0xff]
    %v64 = vld [vmem:[#allocation5 + $0x68] sm:$0xff]
    %v65 = vld [vmem:[#allocation5 + $0x70] sm:$0xff]
    %v66 = vld [vmem:[#allocation5 + $0x78] sm:$0xff]
    %v67 = vld [vmem:[#allocation5 + $0x80] sm:$0xff]
    %v68 = vld [vmem:[#allocation5 + $0x88] sm:$0xff]
    %v69 = vld [vmem:[#allocation5 + $0x90] sm:$0xff]
    %v70 = vld [vmem:[#allocation5 + $0x98] sm:$0xff]
    %v71 = vld [vmem:[#allocation5 + $0xa0] sm:$0xff]
    %v72 = vld [vmem:[#allocation5 + $0xa8] sm:$0xff]
    %v73 = vld [vmem:[#allocation5 + $0xb0] sm:$0xff]
    %v74 = vld [vmem:[#allocation5 + $0xb8] sm:$0xff]
    %v75 = vld [vmem:[#allocation5 + $0xc0] sm:$0xff]
    %v76 = vld [vmem:[#allocation5 + $0xc8] sm:$0xff]
    %v77 = vld [vmem:[#allocation5 + $0xd0] sm:$0xff]
    %v78 = vld [vmem:[#allocation5 + $0xd8] sm:$0xff]
    %v79 = vld [vmem:[#allocation5 + $0xe0] sm:$0xff]
    %v80 = vld [vmem:[#allocation5 + $0xe8] sm:$0xff]
    %v81 = vld [vmem:[#allocation5 + $0xf0] sm:$0xff]
    %v82 = vld [vmem:[#allocation5 + $0xf8] sm:$0xff]
    %v83 = vld [vmem:[%s2] sm:$0x3]
    %v85 = vlaneseq
    %v86 = vshrl.u32 %v85, 7
    %v87 = vsub.s32 0, %v86
    %v88 = vrot.slane %v83, %v87
    %v89 = vlaneseq
    %v90 = vshrl.u32 %v89, 7
    %v91 = vsub.s32 1, %v90
    %v92 = vrot.slane %v83, %v91
    %95 = vmatprep.subr.mxu0 %v52
    %96 = vmatpush1.msra.mxu0 %v51
    %97 = vmatprep.subr.mxu0 %v54
    %98 = vmatpush1.msra.mxu0 %v53
    %99 = vmatprep.subr.mxu0 %v56
    %100 = vmatpush1.msra.mxu0 %v55
    %101 = vmatprep.subr.mxu0 %v58
    %102 = vmatpush1.msra.mxu0 %v57
    %103 = vmatprep.subr.mxu0 %v60
    %104 = vmatpush1.msra.mxu0 %v59
    %105 = vmatprep.subr.mxu0 %v62
    %106 = vmatpush1.msra.mxu0 %v61
    %107 = vmatprep.subr.mxu0 %v64
    %108 = vmatpush1.msra.mxu0 %v63
    %109 = vmatprep.subr.mxu0 %v66
    %110 = vmatpush1.msra.mxu0 %v65
    %111 = vmatprep.subr.mxu0 %v68
    %112 = vmatpush1.msra.mxu0 %v67
    %113 = vmatprep.subr.mxu0 %v70
    %114 = vmatpush1.msra.mxu0 %v69
    %115 = vmatprep.subr.mxu0 %v72
    %116 = vmatpush1.msra.mxu0 %v71
    %117 = vmatprep.subr.mxu0 %v74
    %118 = vmatpush1.msra.mxu0 %v73
    %119 = vmatprep.subr.mxu0 %v76
    %120 = vmatpush1.msra.mxu0 %v75
    %121 = vmatprep.subr.mxu0 %v78
    %122 = vmatpush1.msra.mxu0 %v77
    %123 = vmatprep.subr.mxu0 %v80
    %124 = vmatpush1.msra.mxu0 %v79
    %125 = vmatprep.subr.mxu0 %v82
    %126 = vmatpush1.msra.mxu0 %v81
    %127 = vmatprep.subr.mxu0 0.0
    %128 = vmatpush1.msra.mxu0 0.0
    %129 = vmatprep.subr.mxu0 0.0
    %130 = vmatpush1.msra.mxu0 0.0
    %131 = vmatprep.subr.mxu0 0.0
    %132 = vmatpush1.msra.mxu0 0.0
    %133 = vmatprep.subr.mxu0 0.0
    %134 = vmatpush1.msra.mxu0 0.0
    %135 = vmatprep.subr.mxu0 0.0
    %136 = vmatpush1.msra.mxu0 0.0
    %137 = vmatprep.subr.mxu0 0.0
    %138 = vmatpush1.msra.mxu0 0.0
    %139 = vmatprep.subr.mxu0 0.0
    %140 = vmatpush1.msra.mxu0 0.0
    %141 = vmatprep.subr.mxu0 0.0
    %142 = vmatpush1.msra.mxu0 0.0
    %143 = vmatprep.subr.mxu0 0.0
    %144 = vmatpush1.msra.mxu0 0.0
    %145 = vmatprep.subr.mxu0 0.0
    %146 = vmatpush1.msra.mxu0 0.0
    %147 = vmatprep.subr.mxu0 0.0
    %148 = vmatpush1.msra.mxu0 0.0
    %149 = vmatprep.subr.mxu0 0.0
    %150 = vmatpush1.msra.mxu0 0.0
    %151 = vmatprep.subr.mxu0 0.0
    %152 = vmatpush1.msra.mxu0 0.0
    %153 = vmatprep.subr.mxu0 0.0
    %154 = vmatpush1.msra.mxu0 0.0
    %155 = vmatprep.subr.mxu0 0.0
    %156 = vmatpush1.msra.mxu0 0.0
    %157 = vmatprep.subr.mxu0 0.0
    %158 = vmatpush1.msra.mxu0 0.0
    %159 = vmatprep.mubr.f32.mxu0 0.0
    %160 = vmatmul.mubr.f32.gmra.mrb[0].mxu0 %v43
    %v161 = vpop.f32.mrb[0].mxu0
    %v162 = vadd.f32 %v88, %v161
    %v163 = vpop.f32.mrb[0].mxu0
    %v164 = vadd.f32 %v92, %v163
    %165 = vmatprep.mubr.f32.mxu0 0.0
    %166 = vmatmul.mubr.f32.gmra.mrb[0].mxu0 %v44
    %v167 = vpop.f32.mrb[0].mxu0
    %v168 = vadd.f32 %v88, %v167
    %v169 = vpop.f32.mrb[0].mxu0
    %v170 = vadd.f32 %v92, %v169
    %171 = vmatprep.mubr.f32.mxu0 0.0
    %172 = vmatmul.mubr.f32.gmra.mrb[0].mxu0 %v45
    %v173 = vpop.f32.mrb[0].mxu0
    %v174 = vadd.f32 %v88, %v173
    %v175 = vpop.f32.mrb[0].mxu0
    %v176 = vadd.f32 %v92, %v175
    %177 = vmatprep.mubr.f32.mxu0 0.0
    %178 = vmatmul.mubr.f32.gmra.mrb[0].mxu0 %v46
    %v179 = vpop.f32.mrb[0].mxu0
    %v180 = vadd.f32 %v88, %v179
    %v181 = vpop.f32.mrb[0].mxu0
    %v182 = vadd.f32 %v92, %v181
    %183 = vmatprep.mubr.f32.mxu0 0.0
    %184 = vmatmul.mubr.f32.gmra.mrb[0].mxu0 %v47
    %v185 = vpop.f32.mrb[0].mxu0
    %v186 = vadd.f32 %v88, %v185
    %v187 = vpop.f32.mrb[0].mxu0
    %v188 = vadd.f32 %v92, %v187
    %189 = vmatprep.mubr.f32.mxu0 0.0
    %190 = vmatmul.mubr.f32.gmra.mrb[0].mxu0 %v48
    %v191 = vpop.f32.mrb[0].mxu0
    %v192 = vadd.f32 %v88, %v191
    %v193 = vpop.f32.mrb[0].mxu0
    %v194 = vadd.f32 %v92, %v193
    %195 = vmatprep.mubr.f32.mxu0 0.0
    %196 = vmatmul.mubr.f32.gmra.mrb[0].mxu0 %v49
    %v197 = vpop.f32.mrb[0].mxu0
    %v198 = vadd.f32 %v88, %v197
    %v199 = vpop.f32.mrb[0].mxu0
    %v200 = vadd.f32 %v92, %v199
    %201 = vmatprep.mubr.f32.mxu0 0.0
    %202 = vmatmul.mubr.f32.gmra.mrb[0].mxu0 %v50
    %v203 = vpop.f32.mrb[0].mxu0
    %v204 = vadd.f32 %v88, %v203
    %v205 = vpop.f32.mrb[0].mxu0
    %v206 = vadd.f32 %v92, %v205
    %207 = vdwg.mxu0
    %208 = vst [vmem:[#allocation7] sm:$0xff] %v162
    %209 = vst [vmem:[#allocation7 + $0x8] sm:$0xff] %v164
    %210 = vst [vmem:[#allocation7 + $0x10] sm:$0xff] %v168
    %211 = vst [vmem:[#allocation7 + $0x18] sm:$0xff] %v170
    %212 = vst [vmem:[#allocation7 + $0x20] sm:$0xff] %v174
    %213 = vst [vmem:[#allocation7 + $0x28] sm:$0xff] %v176
    %214 = vst [vmem:[#allocation7 + $0x30] sm:$0xff] %v180
    %215 = vst [vmem:[#allocation7 + $0x38] sm:$0xff] %v182
    %216 = vst [vmem:[#allocation7 + $0x40] sm:$0xff] %v186
    %217 = vst [vmem:[#allocation7 + $0x48] sm:$0xff] %v188
    %218 = vst [vmem:[#allocation7 + $0x50] sm:$0xff] %v192
    %219 = vst [vmem:[#allocation7 + $0x58] sm:$0xff] %v194
    %220 = vst [vmem:[#allocation7 + $0x60] sm:$0xff] %v198
    %221 = vst [vmem:[#allocation7 + $0x68] sm:$0xff] %v200
    %222 = vst [vmem:[#allocation7 + $0x70] sm:$0xff] %v204
    %223 = vst [vmem:[#allocation7 + $0x78] sm:$0xff] %v206
    // Predicated region
    $region22: #{tpu_custom_call.1} parent=1 // pred_check
      _
    $region23: #{tpu_custom_call.1} parent=1 // pred_check_branch
      %225 = sbr.rel (0) target = $region25
    $region24: #{tpu_custom_call.1} parent=1 // pred_region
      %s227 = ssub.s32 2048, 2048
      %228 = vsyncadd [#allocation4], %s227
      %s229 = sshll.u32 [#allocation7], 4
      %s230 = int_to_ptr.vmem [resolvable:$true] %s229
      %235 = dma.vmem_to_hbm [thread:$0]  %s230, 2048, %s3, [#allocation4], 256, 256, 16
    $region25: #{tpu_custom_call.1} parent=1 // pred_fallthru
      _
    // Predicated region
    $region26: #{tpu_custom_call.1} parent=1 // pred_check
      _
    $region27: #{tpu_custom_call.1} parent=1 // pred_check_branch
      %237 = sbr.rel (0) target = $region29
    $region28: #{tpu_custom_call.1} parent=1 // pred_region
      %238 = dma.done [#allocation4], 2048
    $region29: #{tpu_custom_call.1} parent=1 // pred_fallthru
      _
    %239 = vsyncpa [#allocation3], 1
    %240 = vsyncpa [#allocation6], 1
    %241 = vsyncpa [#allocation4], 1

</llo_original>
